<compile_context>
chip_gen: v7x
topology: tpu7x:2x2x1
jax: 0.10.0
libtpu: 0.0.40
codegen_flags: <defaults>
</compile_context>

<pallas_src>
import math

import jax
import jax.numpy as jnp
from jax.experimental import pallas as pl
from jax.experimental.pallas import tpu as pltpu


def _sine_kernel(x_ref, p_ref, lin_ref, per_ref):
    # x_ref: (TM, C) row tile; p_ref: (4, C) fused [w_lin; b_lin; w_per; b_per].
    x = x_ref[...].astype(jnp.float32)
    p = p_ref[...].astype(jnp.float32)
    wl, bl, wp, bp = p[0:1, :], p[1:2, :], p[2:3, :], p[3:4, :]
    lin_ref[...] = (x * wl + bl).astype(lin_ref.dtype)
    per_ref[...] = jnp.sin(x * wp + bp).astype(per_ref.dtype)


def sine_forward(x, w_lin, b_lin, w_per, b_per):
    """x: (..., N); params: (N,) f32. Returns (..., N, 2), matching the module."""
    orig_shape = x.shape
    n = orig_shape[-1]
    m = 1
    for d in orig_shape[:-1]:
        m *= d

    out_dtype = jnp.promote_types(x.dtype, jnp.float32)  # module params are f32
    x2d = x.reshape(m, n)

    # ---- Lane folding: make the kernel's last dim lane-dense (128 when possible).
    if n < 128 and 128 % n == 0:
        f = math.gcd(m, 128 // n)
    else:
        f = 1
    c = f * n
    m_f = m // f
    x2d = x2d.reshape(m_f, c)                      # contiguous -> free view

    # Fused parameter block (4, C), kept in f32.
    params = jnp.stack([w_lin, b_lin, w_per, b_per]).astype(jnp.float32)  # (4, n)
    if f > 1:
        params = jnp.tile(params, (1, f))                                 # (4, C)

    # ---- Row-tile selection.
    in_item = jnp.dtype(x.dtype).itemsize
    out_item = jnp.dtype(out_dtype).itemsize
    sublane = max(8, 32 // in_item)                # 8 for f32, 16 for bf16
    if m_f <= sublane:
        tm = m_f                                   # single full block (always legal)
    else:
        tm = (2 * 1024 * 1024) // (c * in_item)    # ~2 MiB input tile
        tm = min(tm, max(512, pl.cdiv(m_f, 16)))   # keep >= ~16 grid steps (v7x 2 TCs)
        tm = max(sublane, (tm // sublane) * sublane)
        if tm >= m_f:
            tm = m_f
    grid = (pl.cdiv(m_f, tm),)                     # partial tail block is masked

    cost = pl.CostEstimate(
        flops=4 * m * n,                           # 2 mul + 2 add per element
        transcendentals=m * n,                     # sin
        bytes_accessed=m * n * in_item + 2 * m * n * out_item + 4 * c * 4,
    )

    row_spec = pl.BlockSpec((tm, c), lambda i: (i, 0))
    out_spec = pl.BlockSpec((tm, c), lambda i: (i, 0))
    par_spec = pl.BlockSpec((4, c), lambda i: (0, 0))

    # 2 buffers x (1 input + 2 output) tiles + params; cap under v7x's 64 MiB physical.
    need = 2 * (tm * c * in_item + 2 * tm * c * out_item) + 4 * c * 4
    vmem_limit = int(min(48 * 1024 * 1024, max(16 * 1024 * 1024, 2 * need)))

    out_lin, out_per = pl.pallas_call(
        _sine_kernel,
        out_shape=(
            jax.ShapeDtypeStruct((m_f, c), out_dtype),
            jax.ShapeDtypeStruct((m_f, c), out_dtype),
        ),
        grid_spec=pltpu.PrefetchScalarGridSpec(
            num_scalar_prefetch=0,
            grid=grid,
            in_specs=[row_spec, par_spec],
            out_specs=[out_spec, out_spec],
        ),
        compiler_params=pltpu.CompilerParams(
            dimension_semantics=("parallel",),
            vmem_limit_bytes=vmem_limit,
        ),
        cost_estimate=cost,
    )(x2d, params)

    # Undo the lane fold: free contiguous views back to the original shape.
    out_lin = out_lin.reshape(orig_shape)
    out_per = out_per.reshape(orig_shape)
    # cat([unsqueeze(-1), unsqueeze(-1)], -1) == stack on a new last axis.
    return jnp.stack([out_lin, out_per], axis=-1)


if __name__ == "__main__":
    # Small shapes consistent with the module: tokens with input_size features.
    batch, seq, input_size = 2, 8, 32

    key = jax.random.PRNGKey(0)
    kx, kwl, kbl, kwp, kbp = jax.random.split(key, 5)

    x = jax.random.normal(kx, (batch, seq, input_size), dtype=jnp.float32)
    w_lin = jax.random.normal(kwl, (input_size,), dtype=jnp.float32)
    b_lin = jax.random.normal(kbl, (input_size,), dtype=jnp.float32)
    w_per = jax.random.normal(kwp, (input_size,), dtype=jnp.float32)
    b_per = jax.random.normal(kbp, (input_size,), dtype=jnp.float32)

    out = sine_forward(x, w_lin, b_lin, w_per, b_per)
    jax.block_until_ready(out)

    # Pure-JAX reference (matches the PyTorch forward exactly).
    ref_lin = x * w_lin + b_lin
    ref_per = jnp.sin(x * w_per + b_per)
    ref = jnp.concatenate([ref_lin[..., None], ref_per[..., None]], axis=-1)

    assert out.shape == (batch, seq, input_size, 2), out.shape
    assert out.shape == ref.shape
    assert jnp.allclose(out, ref, atol=1e-6, rtol=1e-6), "mismatch vs reference"

    print("KERNEL_OK")
</pallas_src>

<mosaic_0001>
module attributes {stable_mosaic.version = 11 : i64} {
  func.func @_sine_kernel(%arg0: i32, %arg1: memref<4x128xf32, #tpu.memory_space<vmem>>, %arg2: memref<4x128xf32, #tpu.memory_space<vmem>>, %arg3: memref<4x128xf32, #tpu.memory_space<vmem>>, %arg4: memref<4x128xf32, #tpu.memory_space<vmem>>) attributes {dimension_semantics = [#tpu.dimension_semantics<parallel>], iteration_bounds = array<i64: 1>, scalar_prefetch = 0 : i64, scratch_operands = 0 : i64, tpu.core_type = #tpu.core_type<tc>, window_params = [{transform_indices = @transform_0, window_bounds = array<i64: 4, 128>}, {pipeline_mode = #tpu.pipeline_mode<synchronous>, transform_indices = @transform_1, window_bounds = array<i64: 4, 128>}, {transform_indices = @transform_2, window_bounds = array<i64: 4, 128>}, {transform_indices = @transform_3, window_bounds = array<i64: 4, 128>}]} {
    %c0 = arith.constant 0 : index
    %c0_0 = arith.constant 0 : index
    %0 = vector.load %arg1[%c0, %c0_0] : memref<4x128xf32, #tpu.memory_space<vmem>>, vector<4x128xf32>
    %c0_1 = arith.constant 0 : index
    %c0_2 = arith.constant 0 : index
    %1 = vector.load %arg2[%c0_1, %c0_2] : memref<4x128xf32, #tpu.memory_space<vmem>>, vector<4x128xf32>
    %2 = vector.extract_strided_slice %1 {offsets = [0, 0], sizes = [1, 128], strides = [1, 1]} : vector<4x128xf32> to vector<1x128xf32>
    %3 = vector.extract_strided_slice %1 {offsets = [1, 0], sizes = [1, 128], strides = [1, 1]} : vector<4x128xf32> to vector<1x128xf32>
    %4 = vector.extract_strided_slice %1 {offsets = [2, 0], sizes = [1, 128], strides = [1, 1]} : vector<4x128xf32> to vector<1x128xf32>
    %5 = vector.extract_strided_slice %1 {offsets = [3, 0], sizes = [1, 128], strides = [1, 1]} : vector<4x128xf32> to vector<1x128xf32>
    %6 = vector.broadcast %2 : vector<1x128xf32> to vector<4x128xf32>
    %7 = arith.mulf %0, %6 : vector<4x128xf32>
    %8 = vector.broadcast %3 : vector<1x128xf32> to vector<4x128xf32>
    %9 = arith.addf %7, %8 : vector<4x128xf32>
    %c0_3 = arith.constant 0 : index
    %c0_4 = arith.constant 0 : index
    %10 = vector.load %arg3[%c0_3, %c0_4] : memref<4x128xf32, #tpu.memory_space<vmem>>, vector<4x128xf32>
    tpu.vector_store %arg3[%c0_3, %c0_4], %9 {strides = array<i32>} : memref<4x128xf32, #tpu.memory_space<vmem>>, vector<4x128xf32>,
    %11 = vector.broadcast %4 : vector<1x128xf32> to vector<4x128xf32>
    %12 = arith.mulf %0, %11 : vector<4x128xf32>
    %13 = vector.broadcast %5 : vector<1x128xf32> to vector<4x128xf32>
    %14 = arith.addf %12, %13 : vector<4x128xf32>
    %15 = math.sin %14 : vector<4x128xf32>
    %c0_5 = arith.constant 0 : index
    %c0_6 = arith.constant 0 : index
    %16 = vector.load %arg4[%c0_5, %c0_6] : memref<4x128xf32, #tpu.memory_space<vmem>>, vector<4x128xf32>
    tpu.vector_store %arg4[%c0_5, %c0_6], %15 {strides = array<i32>} : memref<4x128xf32, #tpu.memory_space<vmem>>, vector<4x128xf32>,
    return
  }
  func.func @transform_0(%arg0: i32) -> (i32, i32) {
    %c0_i32 = arith.constant 0 : i32
    %c0_i32_0 = arith.constant 0 : i32
    return %arg0, %c0_i32 : i32, i32
  }
  func.func @transform_1(%arg0: i32) -> (i32, i32) {
    %c0_i32 = arith.constant 0 : i32
    %c0_i32_0 = arith.constant 0 : i32
    %c0_i32_1 = arith.constant 0 : i32
    return %c0_i32, %c0_i32_0 : i32, i32
  }
  func.func @transform_2(%arg0: i32) -> (i32, i32) {
    %c0_i32 = arith.constant 0 : i32
    %c0_i32_0 = arith.constant 0 : i32
    return %arg0, %c0_i32 : i32, i32
  }
  func.func @transform_3(%arg0: i32) -> (i32, i32) {
    %c0_i32 = arith.constant 0 : i32
    %c0_i32_0 = arith.constant 0 : i32
    return %arg0, %c0_i32 : i32, i32
  }
}

</mosaic_0001>

<llo_original>
// kernel: tpu_custom_call.1
$region0: #{tpu_custom_call.1}
  #allocation0 [shape = 'u32[]', space=smem, size = 0x4, offset = 0x4, fixed_abs, tag = 'smem constant byte address 0x4 - core index']
  #allocation1 [shape = 'u32[144,128]{1,0:T(1,128)}', space=vmem, size = 0x12000, scoped, tag = 'internal scratch']
  %s0 = inlined_call_operand.hbm [shape: f32[4,128], index: 0, kind: input, shape index: {}]
  %s1 = inlined_call_operand.hbm [shape: f32[4,128], index: 1, kind: input, shape index: {}]
  %s2 = inlined_call_operand.hbm [shape: f32[4,128], index: 2, kind: output, shape index: {0}]
  %s3 = inlined_call_operand.hbm [shape: f32[4,128], index: 3, kind: output, shape index: {1}]
  %4 = xla_tuple %s2, %s3
  %s5 = sld [smem:[#allocation0]]
  $region34: #{tpu_custom_call.1} parent=0
    _
  %s7 = ssub.s32 1, %s5
  %s8 = scalar_select 0, %s7, %s5
  $region1: #{tpu_custom_call.1} parent=0
    #allocation2 [shape = 'u8[2048]{0}', space=vmem, size = 0x800, scoped, tag = 'input window, operand 0, single buffered']
    #allocation3 [shape = 's32[1]{0}', space=sflag, size = 0x4, scoped, tag = 'scoped memory for tpu_custom_call.1']
    #allocation4 [shape = 's32[1]{0}', space=sflag, size = 0x4, scoped, tag = 'scoped memory for tpu_custom_call.1']
    #allocation5 [shape = 'u8[2048]{0}', space=vmem, size = 0x800, scoped, tag = 'input window, operand 1, single buffered']
    #allocation6 [shape = 's32[1]{0}', space=sflag, size = 0x4, scoped, tag = 'scoped memory for tpu_custom_call.1']
    #allocation7 [shape = 'u8[2048]{0}', space=vmem, size = 0x800, scoped, tag = 'output window, operand 0, single buffered']
    #allocation8 [shape = 'u8[2048]{0}', space=vmem, size = 0x800, scoped, tag = 'output window, operand 1, single buffered']
    #allocation9 [shape = 's32[1]{0}', space=sflag, size = 0x4, scoped, tag = 'scoped memory for tpu_custom_call.1']
    %9 = vsyncpa [#allocation3], 0
    %10 = vsyncpa [#allocation6], 0
    %11 = vsyncpa [#allocation4], 0
    %12 = vsyncpa [#allocation9], 0
    // Predicated region
    $region2: #{tpu_custom_call.1} parent=1 // pred_check
      _
    $region3: #{tpu_custom_call.1} parent=1 // pred_check_branch
      %14 = sbr.rel (0) target = $region5
    $region4: #{tpu_custom_call.1} parent=1 // pred_region
      %s16 = ssub.s32 64, 64
      %17 = vsyncadd [#allocation3], %s16
      %s19 = sshll.u32 [#allocation2], 4
      %s20 = int_to_ptr.vmem [resolvable:$true] %s19
      %22 = dma.hbm_to_vmem [thread:$0]  %s0, 64, %s20, [#allocation3]
    $region5: #{tpu_custom_call.1} parent=1 // pred_fallthru
      _
    // Predicated region
    $region6: #{tpu_custom_call.1} parent=1 // pred_check
      _
    $region7: #{tpu_custom_call.1} parent=1 // pred_check_branch
      %24 = sbr.rel (0) target = $region9
    $region8: #{tpu_custom_call.1} parent=1 // pred_region
      %s26 = ssub.s32 64, 64
      %27 = vsyncadd [#allocation6], %s26
      %s29 = sshll.u32 [#allocation5], 4
      %s30 = int_to_ptr.vmem [resolvable:$true] %s29
      %32 = dma.hbm_to_vmem [thread:$0]  %s1, 64, %s30, [#allocation6]
    $region9: #{tpu_custom_call.1} parent=1 // pred_fallthru
      _
    // Predicated region
    $region10: #{tpu_custom_call.1} parent=1 // pred_check
      _
    $region11: #{tpu_custom_call.1} parent=1 // pred_check_branch
      %34 = sbr.rel (0) target = $region13
    $region12: #{tpu_custom_call.1} parent=1 // pred_region
      %35 = dma.done [#allocation3], 64
    $region13: #{tpu_custom_call.1} parent=1 // pred_fallthru
      _
    // Predicated region
    $region14: #{tpu_custom_call.1} parent=1 // pred_check
      _
    $region15: #{tpu_custom_call.1} parent=1 // pred_check_branch
      %37 = sbr.rel (0) target = $region17
    $region16: #{tpu_custom_call.1} parent=1 // pred_region
      %38 = dma.done [#allocation6], 64
    $region17: #{tpu_custom_call.1} parent=1 // pred_fallthru
      _
    %v39 = vld [vmem:[#allocation2] sm:$0xf]
    %v40 = vld [vmem:[#allocation5] sm:$0xf]
    %v41 = vlaneseq
    %v42 = vshrl.u32 %v41, 7
    %v43 = vsub.s32 0, %v42
    %v44 = vrot.slane %v40, %v43
    %v45 = vmul.f32 %v39, %v44
    %v46 = vlaneseq
    %v47 = vshrl.u32 %v46, 7
    %v48 = vsub.s32 1, %v47
    %v49 = vrot.slane %v40, %v48
    %v50 = vadd.f32 %v45, %v49
    %51 = vst [vmem:[#allocation7] sm:$0xf] %v50
    %v52 = vlaneseq
    %v53 = vshrl.u32 %v52, 7
    %v54 = vsub.s32 2, %v53
    %v55 = vrot.slane %v40, %v54
    %v56 = vmul.f32 %v39, %v55
    %v57 = vlaneseq
    %v58 = vshrl.u32 %v57, 7
    %v59 = vsub.s32 3, %v58
    %v60 = vrot.slane %v40, %v59
    %v61 = vadd.f32 %v56, %v60
    %v62 = vand.u32 2147483647, %v61
    %vm63 = vcmp.le.f32.partialorder %v62, 0.7853982
    %vm64 = vcmp.lt.s32.totalorder %v61, 0
    %v65 = vand.u32 %v61, 2139095040
    %v66 = vshrl.u32 %v65, 23
    %v67 = vsub.s32 %v66, 127
    %v68 = vand.u32 2147483647, %v61
    %v69 = vand.u32 %v68, 8388607
    %v70 = vor.u32 %v69, 8388608
    %v71 = vsub.s32 0, %v70
    %v72 = vadd.s32 %v67, 1
    %vm73 = vcmp.gt.s32.totalorder %v72, 0
    %v74 = vsel %vm73, %v72, 0
    %v75 = vshrl.u32 %v74, 5
    %v76 = vand.u32 %v74, 31
    %v77 = vsub.s32 32, %v76
    %v78 = vshrl.u32 683565275, %v77
    %v79 = vshll.u32 683565275, %v76
    %v80 = vshrl.u32 2475754826, %v77
    %v81 = vor.u32 %v79, %v80
    %v82 = vshll.u32 2475754826, %v76
    %v83 = vshrl.u32 2131351028, %v77
    %v84 = vor.u32 %v82, %v83
    %v85 = vshll.u32 2131351028, %v76
    %v86 = vshrl.u32 2102212464, %v77
    %v87 = vor.u32 %v85, %v86
    %v88 = vshll.u32 2102212464, %v76
    %v89 = vshrl.u32 920167782, %v77
    %v90 = vor.u32 %v88, %v89
    %v91 = vshll.u32 920167782, %v76
    %v92 = vshrl.u32 1326507024, %v77
    %v93 = vor.u32 %v91, %v92
    %vm94 = vcmp.lt.s32.totalorder %v75, 1
    %vm95 = vcmp.lt.s32.totalorder %v75, 2
    %vm96 = vcmp.lt.s32.totalorder %v75, 3
    %vm97 = vcmp.lt.s32.totalorder %v75, 4
    %v98 = vsel %vm94, %v78, %v81
    %v99 = vsel %vm97, %v87, 2102212464
    %v100 = vsel %vm96, %v84, %v99
    %v101 = vsel %vm95, %v98, %v100
    %v102 = vsel %vm94, %v81, %v84
    %v103 = vsel %vm97, %v90, 920167782
    %v104 = vsel %vm96, %v87, %v103
    %v105 = vsel %vm95, %v102, %v104
    %v106 = vsel %vm94, %v84, %v87
    %v107 = vsel %vm97, %v93, 1326507024
    %v108 = vsel %vm96, %v90, %v107
    %v109 = vsel %vm95, %v106, %v108
    %v110 = vshll.u32 %v70, 8
    %v111 = vmul.u32.u64.compose %v110, %v109
    %v112 = vextract.low.u32 %v111
    %v113 = vextract.high.u32 %v111
    %v114 = vmul.u32.u64.compose %v110, %v105
    %v115 = vextract.low.u32 %v114
    %v116 = vextract.high.u32 %v114
    %v117 = vmul.u32 %v110, %v101
    %v118 = vadd.s32 %v113, %v115
    %vm119 = vc.u32 %v113, %v115
    %v120 = vadd.s32 %v116, 1
    %v121 = vsel %vm119, %v120, %v116
    %v122 = vadd.s32 %v117, %v121
    %v123 = vadd.s32 %v122, 536870912
    %v124 = vshrl.u32 %v123, 30
    %v125 = vshll.u32 %v124, 30
    %v126 = vsub.s32 %v122, %v125
    %vm127 = vcmp.lt.s32.totalorder %v126, 0
    %v128 = vsub.s32 0, %v126
    %v129 = vsel %vm127, %v128, %v126
    %v130 = vclz %v129
    %v131 = vsub.s32 %v130, 2
    %vm132 = vcmp.gt.s32.totalorder 0, %v131
    %v133 = vsel %vm132, 0, %v131
    %v134 = vsub.s32 32, %v133
    %v135 = vshll.u32 %v126, %v133
    %v136 = vshrl.u32 %v118, %v134
    %v137 = vor.u32 %v135, %v136
    %v138 = vsub.s32 4294967266, %v133
    %v139 = vadd.s32 %v138, 127
    %v140 = vshll.u32 %v139, 23
    %v141 = vor.u32 4788187, %v140
    %v142 = vand.u32 2147483647, %v141
    %v144 = vcvt.s32.f32 %v137
    %v145 = vmul.f32 %v144, %v142
    %v146 = vxor.u32 %v145, 2147483648
    %v147 = vsel %vm64, %v146, %v145
    %v148 = vsub.s32 4, %v124
    %v149 = vsel %vm64, %v148, %v124
    %v150 = vsel %vm63, %v61, %v147
    %v151 = vsel %vm63, 0, %v149
    %v152 = vcosq.f32.pop %v150
    %v153 = vsinq.f32.pop %v150
    %vm154 = vweird.f32 %v61
    %v155 = vadd.s32 %v151, 3
    %v156 = vand.u32 %v155, 3
    %vm157 = vcmp.lt.s32.totalorder %v156, 2
    %vm158 = vcmp.eq.s32.totalorder %v156, 0
    %v159 = vxor.u32 %v153, 2147483648
    %v160 = vsel %vm158, %v152, %v159
    %vm161 = vcmp.eq.s32.totalorder %v156, 2
    %v162 = vxor.u32 %v152, 2147483648
    %v163 = vsel %vm161, %v162, %v153
    %v164 = vsel %vm157, %v160, %v163
    %v165 = vsel %vm154, nan, %v164
    %166 = vst [vmem:[#allocation8] sm:$0xf] %v165
    // Predicated region
    $region18: #{tpu_custom_call.1} parent=1 // pred_check
      _
    $region19: #{tpu_custom_call.1} parent=1 // pred_check_branch
      %168 = sbr.rel (0) target = $region21
    $region20: #{tpu_custom_call.1} parent=1 // pred_region
      %s170 = ssub.s32 64, 64
      %171 = vsyncadd [#allocation4], %s170
      %s173 = sshll.u32 [#allocation7], 4
      %s174 = int_to_ptr.vmem [resolvable:$true] %s173
      %176 = dma.vmem_to_hbm [thread:$0]  %s174, 64, %s2, [#allocation4]
    $region21: #{tpu_custom_call.1} parent=1 // pred_fallthru
      _
    // Predicated region
    $region22: #{tpu_custom_call.1} parent=1 // pred_check
      _
    $region23: #{tpu_custom_call.1} parent=1 // pred_check_branch
      %178 = sbr.rel (0) target = $region25
    $region24: #{tpu_custom_call.1} parent=1 // pred_region
      %s180 = ssub.s32 64, 64
      %181 = vsyncadd [#allocation9], %s180
      %s183 = sshll.u32 [#allocation8], 4
      %s184 = int_to_ptr.vmem [resolvable:$true] %s183
      %186 = dma.vmem_to_hbm [thread:$0]  %s184, 64, %s3, [#allocation9]
    $region25: #{tpu_custom_call.1} parent=1 // pred_fallthru
      _
    // Predicated region
    $region26: #{tpu_custom_call.1} parent=1 // pred_check
      _
    $region27: #{tpu_custom_call.1} parent=1 // pred_check_branch
      %188 = sbr.rel (0) target = $region29
    $region28: #{tpu_custom_call.1} parent=1 // pred_region
      %189 = dma.done [#allocation4], 64
    $region29: #{tpu_custom_call.1} parent=1 // pred_fallthru
      _
    // Predicated region
    $region30: #{tpu_custom_call.1} parent=1 // pred_check
      _
    $region31: #{tpu_custom_call.1} parent=1 // pred_check_branch
      %191 = sbr.rel (0) target = $region33
    $region32: #{tpu_custom_call.1} parent=1 // pred_region
      %192 = dma.done [#allocation9], 64
    $region33: #{tpu_custom_call.1} parent=1 // pred_fallthru
      _
    %193 = vsyncpa [#allocation3], 1
    %194 = vsyncpa [#allocation6], 1
    %195 = vsyncpa [#allocation4], 1
    %196 = vsyncpa [#allocation9], 1

</llo_original>
